<compile_context>
chip_gen: v6e
topology: v6e:2x2x1
jax: 0.10.0
libtpu: 0.0.40
codegen_flags: <defaults>
</compile_context>

<pallas_src>
import functools

import jax
import jax.numpy as jnp
from jax.experimental import pallas as pl
from jax.experimental.pallas import tpu as pltpu

STUDENT_TEMP = 0.1
TEACHER_TEMP = 0.04
CENTER_MOMENTUM = 0.9


def _cdiv(a, b):
    return -(-a // b)


def _round_up(x, m):
    return _cdiv(x, m) * m


def _dino_loss_kernel(t_ref, s_ref, c_ref, loss_ref, center_ref, *,
                      batch, needs_mask):
    """One batch tile: t_ref (Nt, TB, D), s_ref (Ns, TB, D), c_ref (1, D).

    Writes lane-dense partial sums:
      loss_ref   (1, 1, D): sum over off-diagonal (t, s) pairs and tile rows of
                            teacher_softmax * student_log_softmax (unnegated).
      center_ref (1, 1, D): sum over teacher views and tile rows of raw teacher
                            outputs (for the EMA center update).
    """
    nt, tb, _ = t_ref.shape
    ns = s_ref.shape[0]
    n_diag = min(nt, ns)

    inv_t_temp = 1.0 / TEACHER_TEMP
    inv_s_temp = 1.0 / STUDENT_TEMP
    center = c_ref[...].astype(jnp.float32)                 # (1, D)

    # ---- teacher pass: softmax once per view; fused running sums ------------
    t_raw_sum = None          # for the center EMA
    t_sm_sum = None           # SUM_t softmax(teacher)
    t_sm_diag = []            # only the first min(Nt, Ns) softmaxes stay live
    for ti in range(nt):
        t_raw = t_ref[ti].astype(jnp.float32)               # (TB, D)
        t_raw_sum = t_raw if t_raw_sum is None else t_raw_sum + t_raw
        t = (t_raw - center) * inv_t_temp
        t = t - jnp.max(t, axis=-1, keepdims=True)
        t_exp = jnp.exp(t)
        denom = jnp.sum(t_exp, axis=-1, keepdims=True)
        t_sm = t_exp * pl.reciprocal(denom, approx=False)
        t_sm_sum = t_sm if t_sm_sum is None else t_sm_sum + t_sm
        if ti < n_diag:
            t_sm_diag.append(t_sm)

    # ---- student pass: log-softmax once per view; fused diag correction -----
    s_lsm_sum = None          # SUM_s log_softmax(student)
    diag_acc = None           # SUM_{i<min} t_sm[i] * s_lsm[i]
    for si in range(ns):
        s = s_ref[si].astype(jnp.float32) * inv_s_temp       # (TB, D)
        s = s - jnp.max(s, axis=-1, keepdims=True)
        s_lsm = s - jnp.log(jnp.sum(jnp.exp(s), axis=-1, keepdims=True))
        s_lsm_sum = s_lsm if s_lsm_sum is None else s_lsm_sum + s_lsm
        if si < n_diag:
            dterm = t_sm_diag[si] * s_lsm
            diag_acc = dterm if diag_acc is None else diag_acc + dterm

    # ---- sum over all (t != s) pairs via the sum-product identity -----------
    pair_sum = t_sm_sum * s_lsm_sum
    if diag_acc is not None:
        pair_sum = pair_sum - diag_acc

    if needs_mask:
        # Zero out padded batch rows (raw teacher padding is already zero, so
        # only the loss partial needs masking).
        row0 = pl.program_id(0) * tb
        row_ids = row0 + jax.lax.broadcasted_iota(jnp.int32, (tb, 1), 0)
        pair_sum = pair_sum * (row_ids < batch).astype(pair_sum.dtype)

    # Sum over this tile's batch rows; keep lanes (D) — final reduce in wrapper.
    loss_ref[0] = jnp.sum(pair_sum, axis=0, keepdims=True)        # (1, D)
    center_ref[0] = jnp.sum(t_raw_sum, axis=0, keepdims=True)     # (1, D)


def _tpu_vmem_capacity_bytes():
    try:
        info = pltpu.get_tpu_info()
        v = getattr(info, "vmem_capacity_bytes", None)
        if v:
            return int(v)
    except Exception:
        pass
    return 128 << 20   # v5e/v6e default; v7x (64 MiB) handled when query works


def _pick_batch_tile(b, d, n_views, live_tiles, in_itemsize, budget_bytes):
    """Batch-tile size whose per-step footprint (double-buffered inputs +
    live f32 temporaries) fits `budget_bytes`. Never returns a whole-batch
    fallback; pads instead. Prefers >=2 tiles when the batch allows (v7x)."""
    align = 16 if in_itemsize < 4 else 8
    bytes_per_row = 2 * n_views * d * in_itemsize + live_tiles * d * 4
    cap = budget_bytes // max(bytes_per_row, 1)
    cap = max(align, (cap // align) * align)           # clamp; never whole batch

    b_up = _round_up(b, align)
    # >=2 tiles when the batch is big enough: uses both TensorCores on v7x;
    # one extra ~0.35us grid step is negligible on single-TC v5e/v6e.
    two_tile_tb = _round_up(_cdiv(b_up, 2), align) if b_up >= 2 * align else b_up
    tb = min(cap, b_up, two_tile_tb)

    num_tiles = _cdiv(b, tb)
    return tb, num_tiles, num_tiles * tb


def dino_loss(student_views, teacher_views, center):
    """student_views: [Ns, B, D]; teacher_views: [Nt, B, D]; center [1, D].
    f32 or bf16 views accepted (math is f32). Returns (loss, updated center)."""
    ns, b, d = student_views.shape
    nt, b2, d2 = teacher_views.shape
    assert (b, d) == (b2, d2)
    n_loss_terms = nt * ns - min(nt, ns)        # pairs with t_ix != s_ix
    assert n_loss_terms > 0

    center = center.astype(jnp.float32)
    in_itemsize = max(jnp.dtype(student_views.dtype).itemsize,
                      jnp.dtype(teacher_views.dtype).itemsize)

    # Generation-aware VMEM budget (v7x: ~38 MiB of 64; v5e/v6e: 64 of 128).
    vmem_cap = _tpu_vmem_capacity_bytes()
    budget = min(int(vmem_cap * 0.6), 64 << 20)
    # Live f32 (TB, D) temporaries after the fused/identity restructuring:
    #   current view + t_raw_sum + t_sm_sum + s_lsm_sum + diag_acc + min(Nt,Ns)
    live_tiles = 5 + min(nt, ns)
    tb, num_tiles, b_pad = _pick_batch_tile(b, d, ns + nt, live_tiles,
                                            in_itemsize, budget)

    if b_pad != b:
        pad = b_pad - b
        student_views = jnp.pad(student_views, ((0, 0), (0, pad), (0, 0)))
        teacher_views = jnp.pad(teacher_views, ((0, 0), (0, pad), (0, 0)))

    kernel = functools.partial(_dino_loss_kernel, batch=b,
                               needs_mask=(b_pad != b))
    vmem_limit = int(min(vmem_cap * 3 // 4, budget + (16 << 20)))

    loss_part, center_part = pl.pallas_call(
        kernel,
        out_shape=(jax.ShapeDtypeStruct((num_tiles, 1, d), jnp.float32),
                   jax.ShapeDtypeStruct((num_tiles, 1, d), jnp.float32)),
        grid_spec=pltpu.PrefetchScalarGridSpec(
            num_scalar_prefetch=0,
            grid=(num_tiles,),
            in_specs=[
                pl.BlockSpec((nt, tb, d), lambda i: (0, i, 0)),  # teacher views
                pl.BlockSpec((ns, tb, d), lambda i: (0, i, 0)),  # student views
                pl.BlockSpec((1, d), lambda i: (0, 0)),          # center
            ],
            out_specs=[
                pl.BlockSpec((1, 1, d), lambda i: (i, 0, 0)),    # loss partials
                pl.BlockSpec((1, 1, d), lambda i: (i, 0, 0)),    # center partials
            ],
        ),
        compiler_params=pltpu.CompilerParams(
            dimension_semantics=("parallel",),   # batch tiles are independent
            vmem_limit_bytes=vmem_limit),
    )(teacher_views, student_views, center)

    # Tiny final reductions + EMA in plain JAX (sum-then-divide keeps exact
    # mean semantics regardless of batch tiling / padding).
    loss = -jnp.sum(loss_part) / float(n_loss_terms * b)
    batch_center = jnp.sum(center_part, axis=0) / float(nt * b)    # (1, D)
    new_center = center * CENTER_MOMENTUM + batch_center * (1.0 - CENTER_MOMENTUM)
    return loss, new_center


def _reference(student_views, teacher_views, center):
    """Pure-JAX reference mirroring the PyTorch forward."""
    s_lsm = jax.nn.log_softmax(student_views / STUDENT_TEMP, axis=-1)
    t_sm = jax.nn.softmax((teacher_views - center[None]) / TEACHER_TEMP, axis=-1)
    total, n_terms = 0.0, 0
    for ti in range(teacher_views.shape[0]):
        for si in range(student_views.shape[0]):
            if ti == si:
                continue
            total += jnp.mean(jnp.sum(-t_sm[ti] * s_lsm[si], axis=-1))
            n_terms += 1
    loss = total / n_terms
    batch_center = jnp.mean(teacher_views.reshape(-1, teacher_views.shape[-1]),
                            axis=0, keepdims=True)
    new_center = center * CENTER_MOMENTUM + batch_center * (1 - CENTER_MOMENTUM)
    return loss, new_center


if __name__ == "__main__":
    # Small shapes consistent with DINO: 3 student crops, 2 teacher (global)
    # crops, batch=8, out_dim=128.
    NS, NT, B, D = 3, 2, 8, 128
    key = jax.random.PRNGKey(0)
    k1, k2 = jax.random.split(key)
    student_views = jax.random.normal(k1, (NS, B, D), dtype=jnp.float32)
    teacher_views = jax.random.normal(k2, (NT, B, D), dtype=jnp.float32)
    center = jnp.zeros((1, D), dtype=jnp.float32)   # buffer init: torch.zeros(1, out_dim)

    loss, new_center = dino_loss(student_views, teacher_views, center)
    loss = jax.block_until_ready(loss)
    new_center = jax.block_until_ready(new_center)

    ref_loss, ref_center = _reference(student_views, teacher_views, center)
    assert jnp.allclose(loss, ref_loss, rtol=1e-4, atol=1e-4), (loss, ref_loss)
    assert jnp.allclose(new_center, ref_center, rtol=1e-4, atol=1e-4)

    print("KERNEL_OK")
</pallas_src>

<mosaic_0001>
module attributes {stable_mosaic.version = 11 : i64} {
  func.func @_dino_loss_kernel(%arg0: i32, %arg1: memref<2x8x128xf32, #tpu.memory_space<vmem>>, %arg2: memref<3x8x128xf32, #tpu.memory_space<vmem>>, %arg3: memref<1x128xf32, #tpu.memory_space<vmem>>, %arg4: memref<1x1x128xf32, #tpu.memory_space<vmem>>, %arg5: memref<1x1x128xf32, #tpu.memory_space<vmem>>) attributes {dimension_semantics = [#tpu.dimension_semantics<parallel>], iteration_bounds = array<i64: 1>, scalar_prefetch = 0 : i64, scratch_operands = 0 : i64, tpu.core_type = #tpu.core_type<tc>, window_params = [{transform_indices = @transform_0, window_bounds = array<i64: 2, 8, 128>}, {transform_indices = @transform_1, window_bounds = array<i64: 3, 8, 128>}, {pipeline_mode = #tpu.pipeline_mode<synchronous>, transform_indices = @transform_2, window_bounds = array<i64: 1, 128>}, {transform_indices = @transform_3, window_bounds = array<i64: 1, 1, 128>}, {transform_indices = @transform_4, window_bounds = array<i64: 1, 1, 128>}]} {
    %c0 = arith.constant 0 : index
    %c0_0 = arith.constant 0 : index
    %0 = vector.load %arg3[%c0, %c0_0] : memref<1x128xf32, #tpu.memory_space<vmem>>, vector<1x128xf32>
    %c0_1 = arith.constant 0 : index
    %c0_2 = arith.constant 0 : index
    %c0_3 = arith.constant 0 : index
    %1 = vector.load %arg1[%c0_1, %c0_2, %c0_3] : memref<2x8x128xf32, #tpu.memory_space<vmem>>, vector<1x8x128xf32>
    %2 = vector.shape_cast %1 : vector<1x8x128xf32> to vector<8x128xf32>
    %3 = vector.broadcast %0 : vector<1x128xf32> to vector<8x128xf32>
    %4 = arith.subf %2, %3 : vector<8x128xf32>
    %cst = arith.constant 2.500000e+01 : f32
    %5 = vector.broadcast %cst : f32 to vector<8x128xf32>
    %6 = arith.mulf %4, %5 : vector<8x128xf32>
    %cst_4 = arith.constant dense<0xFF800000> : vector<8xf32>
    %7 = vector.multi_reduction <maximumf>, %6, %cst_4 [1] : vector<8x128xf32> to vector<8xf32>
    %8 = vector.shape_cast %7 : vector<8xf32> to vector<8x1xf32>
    %9 = vector.broadcast %8 : vector<8x1xf32> to vector<8x128xf32>
    %10 = arith.subf %6, %9 : vector<8x128xf32>
    %11 = math.exp %10 : vector<8x128xf32>
    %cst_5 = arith.constant dense<0.000000e+00> : vector<8xf32>
    %12 = vector.multi_reduction <add>, %11, %cst_5 [1] : vector<8x128xf32> to vector<8xf32>
    %13 = vector.shape_cast %12 : vector<8xf32> to vector<8x1xf32>
    %14 = tpu.reciprocal %13 : vector<8x1xf32> -> vector<8x1xf32>
    %15 = vector.broadcast %14 : vector<8x1xf32> to vector<8x128xf32>
    %16 = arith.mulf %11, %15 : vector<8x128xf32>
    %c1 = arith.constant 1 : index
    %c0_6 = arith.constant 0 : index
    %c0_7 = arith.constant 0 : index
    %17 = vector.load %arg1[%c1, %c0_6, %c0_7] : memref<2x8x128xf32, #tpu.memory_space<vmem>>, vector<1x8x128xf32>
    %18 = vector.shape_cast %17 : vector<1x8x128xf32> to vector<8x128xf32>
    %19 = arith.addf %2, %18 : vector<8x128xf32>
    %20 = vector.broadcast %0 : vector<1x128xf32> to vector<8x128xf32>
    %21 = arith.subf %18, %20 : vector<8x128xf32>
    %cst_8 = arith.constant 2.500000e+01 : f32
    %22 = vector.broadcast %cst_8 : f32 to vector<8x128xf32>
    %23 = arith.mulf %21, %22 : vector<8x128xf32>
    %cst_9 = arith.constant dense<0xFF800000> : vector<8xf32>
    %24 = vector.multi_reduction <maximumf>, %23, %cst_9 [1] : vector<8x128xf32> to vector<8xf32>
    %25 = vector.shape_cast %24 : vector<8xf32> to vector<8x1xf32>
    %26 = vector.broadcast %25 : vector<8x1xf32> to vector<8x128xf32>
    %27 = arith.subf %23, %26 : vector<8x128xf32>
    %28 = math.exp %27 : vector<8x128xf32>
    %cst_10 = arith.constant dense<0.000000e+00> : vector<8xf32>
    %29 = vector.multi_reduction <add>, %28, %cst_10 [1] : vector<8x128xf32> to vector<8xf32>
    %30 = vector.shape_cast %29 : vector<8xf32> to vector<8x1xf32>
    %31 = tpu.reciprocal %30 : vector<8x1xf32> -> vector<8x1xf32>
    %32 = vector.broadcast %31 : vector<8x1xf32> to vector<8x128xf32>
    %33 = arith.mulf %28, %32 : vector<8x128xf32>
    %34 = arith.addf %16, %33 : vector<8x128xf32>
    %c0_11 = arith.constant 0 : index
    %c0_12 = arith.constant 0 : index
    %c0_13 = arith.constant 0 : index
    %35 = vector.load %arg2[%c0_11, %c0_12, %c0_13] : memref<3x8x128xf32, #tpu.memory_space<vmem>>, vector<1x8x128xf32>
    %36 = vector.shape_cast %35 : vector<1x8x128xf32> to vector<8x128xf32>
    %cst_14 = arith.constant 1.000000e+01 : f32
    %37 = vector.broadcast %cst_14 : f32 to vector<8x128xf32>
    %38 = arith.mulf %36, %37 : vector<8x128xf32>
    %cst_15 = arith.constant dense<0xFF800000> : vector<8xf32>
    %39 = vector.multi_reduction <maximumf>, %38, %cst_15 [1] : vector<8x128xf32> to vector<8xf32>
    %40 = vector.shape_cast %39 : vector<8xf32> to vector<8x1xf32>
    %41 = vector.broadcast %40 : vector<8x1xf32> to vector<8x128xf32>
    %42 = arith.subf %38, %41 : vector<8x128xf32>
    %43 = math.exp %42 : vector<8x128xf32>
    %cst_16 = arith.constant dense<0.000000e+00> : vector<8xf32>
    %44 = vector.multi_reduction <add>, %43, %cst_16 [1] : vector<8x128xf32> to vector<8xf32>
    %45 = vector.shape_cast %44 : vector<8xf32> to vector<8x1xf32>
    %46 = math.log %45 : vector<8x1xf32>
    %47 = vector.broadcast %46 : vector<8x1xf32> to vector<8x128xf32>
    %48 = arith.subf %42, %47 : vector<8x128xf32>
    %49 = arith.mulf %16, %48 : vector<8x128xf32>
    %c1_17 = arith.constant 1 : index
    %c0_18 = arith.constant 0 : index
    %c0_19 = arith.constant 0 : index
    %50 = vector.load %arg2[%c1_17, %c0_18, %c0_19] : memref<3x8x128xf32, #tpu.memory_space<vmem>>, vector<1x8x128xf32>
    %51 = vector.shape_cast %50 : vector<1x8x128xf32> to vector<8x128xf32>
    %cst_20 = arith.constant 1.000000e+01 : f32
    %52 = vector.broadcast %cst_20 : f32 to vector<8x128xf32>
    %53 = arith.mulf %51, %52 : vector<8x128xf32>
    %cst_21 = arith.constant dense<0xFF800000> : vector<8xf32>
    %54 = vector.multi_reduction <maximumf>, %53, %cst_21 [1] : vector<8x128xf32> to vector<8xf32>
    %55 = vector.shape_cast %54 : vector<8xf32> to vector<8x1xf32>
    %56 = vector.broadcast %55 : vector<8x1xf32> to vector<8x128xf32>
    %57 = arith.subf %53, %56 : vector<8x128xf32>
    %58 = math.exp %57 : vector<8x128xf32>
    %cst_22 = arith.constant dense<0.000000e+00> : vector<8xf32>
    %59 = vector.multi_reduction <add>, %58, %cst_22 [1] : vector<8x128xf32> to vector<8xf32>
    %60 = vector.shape_cast %59 : vector<8xf32> to vector<8x1xf32>
    %61 = math.log %60 : vector<8x1xf32>
    %62 = vector.broadcast %61 : vector<8x1xf32> to vector<8x128xf32>
    %63 = arith.subf %57, %62 : vector<8x128xf32>
    %64 = arith.addf %48, %63 : vector<8x128xf32>
    %65 = arith.mulf %33, %63 : vector<8x128xf32>
    %66 = arith.addf %49, %65 : vector<8x128xf32>
    %c2 = arith.constant 2 : index
    %c0_23 = arith.constant 0 : index
    %c0_24 = arith.constant 0 : index
    %67 = vector.load %arg2[%c2, %c0_23, %c0_24] : memref<3x8x128xf32, #tpu.memory_space<vmem>>, vector<1x8x128xf32>
    %68 = vector.shape_cast %67 : vector<1x8x128xf32> to vector<8x128xf32>
    %cst_25 = arith.constant 1.000000e+01 : f32
    %69 = vector.broadcast %cst_25 : f32 to vector<8x128xf32>
    %70 = arith.mulf %68, %69 : vector<8x128xf32>
    %cst_26 = arith.constant dense<0xFF800000> : vector<8xf32>
    %71 = vector.multi_reduction <maximumf>, %70, %cst_26 [1] : vector<8x128xf32> to vector<8xf32>
    %72 = vector.shape_cast %71 : vector<8xf32> to vector<8x1xf32>
    %73 = vector.broadcast %72 : vector<8x1xf32> to vector<8x128xf32>
    %74 = arith.subf %70, %73 : vector<8x128xf32>
    %75 = math.exp %74 : vector<8x128xf32>
    %cst_27 = arith.constant dense<0.000000e+00> : vector<8xf32>
    %76 = vector.multi_reduction <add>, %75, %cst_27 [1] : vector<8x128xf32> to vector<8xf32>
    %77 = vector.shape_cast %76 : vector<8xf32> to vector<8x1xf32>
    %78 = math.log %77 : vector<8x1xf32>
    %79 = vector.broadcast %78 : vector<8x1xf32> to vector<8x128xf32>
    %80 = arith.subf %74, %79 : vector<8x128xf32>
    %81 = arith.addf %64, %80 : vector<8x128xf32>
    %82 = arith.mulf %34, %81 : vector<8x128xf32>
    %83 = arith.subf %82, %66 : vector<8x128xf32>
    %cst_28 = arith.constant dense<0.000000e+00> : vector<128xf32>
    %84 = vector.multi_reduction <add>, %83, %cst_28 [0] : vector<8x128xf32> to vector<128xf32>
    %85 = vector.shape_cast %84 : vector<128xf32> to vector<1x128xf32>
    %c0_29 = arith.constant 0 : index
    %c0_30 = arith.constant 0 : index
    %c0_31 = arith.constant 0 : index
    %86 = vector.load %arg4[%c0_29, %c0_30, %c0_31] : memref<1x1x128xf32, #tpu.memory_space<vmem>>, vector<1x1x128xf32>
    %87 = vector.shape_cast %86 : vector<1x1x128xf32> to vector<1x128xf32>
    %88 = vector.shape_cast %85 : vector<1x128xf32> to vector<1x1x128xf32>
    tpu.vector_store %arg4[%c0_29, %c0_30, %c0_31], %88 {strides = array<i32>} : memref<1x1x128xf32, #tpu.memory_space<vmem>>, vector<1x1x128xf32>,
    %cst_32 = arith.constant dense<0.000000e+00> : vector<128xf32>
    %89 = vector.multi_reduction <add>, %19, %cst_32 [0] : vector<8x128xf32> to vector<128xf32>
    %90 = vector.shape_cast %89 : vector<128xf32> to vector<1x128xf32>
    %c0_33 = arith.constant 0 : index
    %c0_34 = arith.constant 0 : index
    %c0_35 = arith.constant 0 : index
    %91 = vector.load %arg5[%c0_33, %c0_34, %c0_35] : memref<1x1x128xf32, #tpu.memory_space<vmem>>, vector<1x1x128xf32>
    %92 = vector.shape_cast %91 : vector<1x1x128xf32> to vector<1x128xf32>
    %93 = vector.shape_cast %90 : vector<1x128xf32> to vector<1x1x128xf32>
    tpu.vector_store %arg5[%c0_33, %c0_34, %c0_35], %93 {strides = array<i32>} : memref<1x1x128xf32, #tpu.memory_space<vmem>>, vector<1x1x128xf32>,
    return
  }
  func.func @transform_0(%arg0: i32) -> (i32, i32, i32) {
    %c0_i32 = arith.constant 0 : i32
    %c0_i32_0 = arith.constant 0 : i32
    %c0_i32_1 = arith.constant 0 : i32
    return %c0_i32, %arg0, %c0_i32_0 : i32, i32, i32
  }
  func.func @transform_1(%arg0: i32) -> (i32, i32, i32) {
    %c0_i32 = arith.constant 0 : i32
    %c0_i32_0 = arith.constant 0 : i32
    %c0_i32_1 = arith.constant 0 : i32
    return %c0_i32, %arg0, %c0_i32_0 : i32, i32, i32
  }
  func.func @transform_2(%arg0: i32) -> (i32, i32) {
    %c0_i32 = arith.constant 0 : i32
    %c0_i32_0 = arith.constant 0 : i32
    %c0_i32_1 = arith.constant 0 : i32
    return %c0_i32, %c0_i32_0 : i32, i32
  }
  func.func @transform_3(%arg0: i32) -> (i32, i32, i32) {
    %c0_i32 = arith.constant 0 : i32
    %c0_i32_0 = arith.constant 0 : i32
    %c0_i32_1 = arith.constant 0 : i32
    return %arg0, %c0_i32, %c0_i32_0 : i32, i32, i32
  }
  func.func @transform_4(%arg0: i32) -> (i32, i32, i32) {
    %c0_i32 = arith.constant 0 : i32
    %c0_i32_0 = arith.constant 0 : i32
    %c0_i32_1 = arith.constant 0 : i32
    return %arg0, %c0_i32, %c0_i32_0 : i32, i32, i32
  }
}

</mosaic_0001>

<llo_original>
// kernel: tpu_custom_call.1
$region0: #{tpu_custom_call.1}
  #allocation0 [shape = 'u32[]', space=smem, size = 0x4, offset = 0x4, fixed_abs, tag = 'smem constant byte address 0x4 - core index']
  #allocation1 [shape = 'u32[144,128]{1,0:T(1,128)}', space=vmem, size = 0x12000, scoped, tag = 'internal scratch']
  %s0 = inlined_call_operand.hbm [shape: f32[2,8,128], index: 0, kind: input, shape index: {}]
  %s1 = inlined_call_operand.hbm [shape: f32[3,8,128], index: 1, kind: input, shape index: {}]
  %s2 = inlined_call_operand.vmem [shape: f32[1,128], index: 2, kind: input, shape index: {}]
  %s3 = inlined_call_operand.hbm [shape: f32[1,1,128], index: 3, kind: output, shape index: {0}]
  %s4 = inlined_call_operand.hbm [shape: f32[1,1,128], index: 4, kind: output, shape index: {1}]
  %5 = xla_tuple %s3, %s4
  %s6 = sld [smem:[#allocation0]]
  $region38: #{tpu_custom_call.1} parent=0
    _
  %s8 = ssub.s32 1, %s6
  %s9 = scalar_select 0, %s8, %s6
  $region1: #{tpu_custom_call.1} parent=0
    #allocation2 [shape = 'u8[8192]{0}', space=vmem, size = 0x2000, scoped, tag = 'input window, operand 0, single buffered']
    #allocation3 [shape = 's32[1]{0}', space=sflag, size = 0x4, scoped, tag = 'scoped memory for tpu_custom_call.1']
    #allocation4 [shape = 's32[1]{0}', space=sflag, size = 0x4, scoped, tag = 'scoped memory for tpu_custom_call.1']
    #allocation5 [shape = 'u8[12288]{0}', space=vmem, size = 0x3000, scoped, tag = 'input window, operand 1, single buffered']
    #allocation6 [shape = 's32[1]{0}', space=sflag, size = 0x4, scoped, tag = 'scoped memory for tpu_custom_call.1']
    #allocation7 [shape = 'u8[512]{0}', space=vmem, size = 0x400, scoped, tag = 'output window, operand 0, single buffered']
    #allocation8 [shape = 'u8[512]{0}', space=vmem, size = 0x400, scoped, tag = 'output window, operand 1, single buffered']
    #allocation9 [shape = 's32[1]{0}', space=sflag, size = 0x4, scoped, tag = 'scoped memory for tpu_custom_call.1']
    %10 = vsyncpa [#allocation3], 0
    %11 = vsyncpa [#allocation6], 0
    %12 = vsyncpa [#allocation4], 0
    %13 = vsyncpa [#allocation9], 0
    // Predicated region
    $region2: #{tpu_custom_call.1} parent=1 // pred_check
      _
    $region3: #{tpu_custom_call.1} parent=1 // pred_check_branch
      %15 = sbr.rel (0) target = $region5
    $region4: #{tpu_custom_call.1} parent=1 // pred_region
      %s17 = ssub.s32 256, 256
      %18 = vsyncadd [#allocation3], %s17
      %s19 = sshll.u32 [#allocation2], 4
      %s20 = int_to_ptr.vmem [resolvable:$true] %s19
      %25 = dma.hbm_to_vmem [thread:$0]  %s0, 256, %s20, [#allocation3], 128, 128, 8
    $region5: #{tpu_custom_call.1} parent=1 // pred_fallthru
      _
    // Predicated region
    $region6: #{tpu_custom_call.1} parent=1 // pred_check
      _
    $region7: #{tpu_custom_call.1} parent=1 // pred_check_branch
      %27 = sbr.rel (0) target = $region9
    $region8: #{tpu_custom_call.1} parent=1 // pred_region
      %s29 = ssub.s32 384, 384
      %30 = vsyncadd [#allocation6], %s29
      %s31 = sshll.u32 [#allocation5], 4
      %s32 = int_to_ptr.vmem [resolvable:$true] %s31
      %37 = dma.hbm_to_vmem [thread:$0]  %s1, 384, %s32, [#allocation6], 128, 128, 8
    $region9: #{tpu_custom_call.1} parent=1 // pred_fallthru
      _
    // Predicated region
    $region10: #{tpu_custom_call.1} parent=1 // pred_check
      _
    $region11: #{tpu_custom_call.1} parent=1 // pred_check_branch
      %39 = sbr.rel (0) target = $region13
    $region12: #{tpu_custom_call.1} parent=1 // pred_region
      _
    $region13: #{tpu_custom_call.1} parent=1 // pred_fallthru
      _
    // Predicated region
    $region14: #{tpu_custom_call.1} parent=1 // pred_check
      _
    $region15: #{tpu_custom_call.1} parent=1 // pred_check_branch
      %41 = sbr.rel (0) target = $region17
    $region16: #{tpu_custom_call.1} parent=1 // pred_region
      %42 = dma.done [#allocation3], 256
    $region17: #{tpu_custom_call.1} parent=1 // pred_fallthru
      _
    // Predicated region
    $region18: #{tpu_custom_call.1} parent=1 // pred_check
      _
    $region19: #{tpu_custom_call.1} parent=1 // pred_check_branch
      %44 = sbr.rel (0) target = $region21
    $region20: #{tpu_custom_call.1} parent=1 // pred_region
      %45 = dma.done [#allocation6], 384
    $region21: #{tpu_custom_call.1} parent=1 // pred_fallthru
      _
    %v46 = vld [vmem:[%s2] sm:$0x1]
    %v47 = vld [vmem:[#allocation2] sm:$0xff]
    %v49 = vlaneseq
    %v50 = vshrl.u32 %v49, 7
    %v51 = vsub.s32 0, %v50
    %v52 = vrot.slane %v46, %v51
    %v54 = vsub.f32 %v47, %v52
    %v55 = vmul.f32 %v54, 25.0
    %56 = vmax.xlane.f32.xlu0 %v55
    %v57 = vpop.xlane.xlu0 %56
    %v58 = vsub.f32 %v55, %v57
    %v59 = vmul.f32 %v58, 1.442695
    %v60 = vpow.pop %v59
    %61 = vadd.xlane.f32.xlu0 %v60
    %v62 = vpop.xlane.xlu0 %61
    %v63 = vrcp.pop %v62
    %v64 = vmul.f32 %v60, %v63
    %s65 = scalar_lea.vmem [#allocation2], 8
    %v66 = vld [vmem:[%s65] sm:$0xff]
    %v67 = vadd.f32 %v47, %v66
    %v68 = vsub.f32 %v66, %v52
    %v69 = vmul.f32 %v68, 25.0
    %70 = vmax.xlane.f32.xlu0 %v69
    %v71 = vpop.xlane.xlu0 %70
    %v72 = vsub.f32 %v69, %v71
    %v73 = vmul.f32 %v72, 1.442695
    %v74 = vpow.pop %v73
    %75 = vadd.xlane.f32.xlu0 %v74
    %v76 = vpop.xlane.xlu0 %75
    %v77 = vrcp.pop %v76
    %v78 = vmul.f32 %v74, %v77
    %v79 = vadd.f32 %v64, %v78
    %v80 = vld [vmem:[#allocation5] sm:$0xff]
    %v81 = vmul.f32 %v80, 10.0
    %82 = vmax.xlane.f32.xlu0 %v81
    %v83 = vpop.xlane.xlu0 %82
    %v84 = vsub.f32 %v81, %v83
    %v85 = vmul.f32 %v84, 1.442695
    %v86 = vpow.pop %v85
    %87 = vadd.xlane.f32.xlu0 %v86
    %v88 = vpop.xlane.xlu0 %87
    %v89 = vlog2.pop %v88
    %v90 = vmul.f32 %v89, 0.6931472
    %v91 = vsub.f32 %v84, %v90
    %v92 = vmul.f32 %v64, %v91
    %s93 = scalar_lea.vmem [#allocation5], 8
    %v94 = vld [vmem:[%s93] sm:$0xff]
    %v95 = vmul.f32 %v94, 10.0
    %96 = vmax.xlane.f32.xlu0 %v95
    %v97 = vpop.xlane.xlu0 %96
    %v98 = vsub.f32 %v95, %v97
    %v99 = vmul.f32 %v98, 1.442695
    %v100 = vpow.pop %v99
    %101 = vadd.xlane.f32.xlu0 %v100
    %v102 = vpop.xlane.xlu0 %101
    %v103 = vlog2.pop %v102
    %v104 = vmul.f32 %v103, 0.6931472
    %v105 = vsub.f32 %v98, %v104
    %v106 = vadd.f32 %v91, %v105
    %v107 = vmul.f32 %v78, %v105
    %v108 = vadd.f32 %v92, %v107
    %s109 = scalar_lea.vmem [#allocation5], 16
    %v110 = vld [vmem:[%s109] sm:$0xff]
    %v111 = vmul.f32 %v110, 10.0
    %112 = vmax.xlane.f32.xlu0 %v111
    %v113 = vpop.xlane.xlu0 %112
    %v114 = vsub.f32 %v111, %v113
    %v115 = vmul.f32 %v114, 1.442695
    %v116 = vpow.pop %v115
    %117 = vadd.xlane.f32.xlu0 %v116
    %v118 = vpop.xlane.xlu0 %117
    %v119 = vlog2.pop %v118
    %v120 = vmul.f32 %v119, 0.6931472
    %v121 = vsub.f32 %v114, %v120
    %v122 = vadd.f32 %v106, %v121
    %v123 = vmul.f32 %v79, %v122
    %v124 = vsub.f32 %v123, %v108
    %v125 = vrot.slane %v124, 4
    %v126 = vadd.f32 %v124, %v125
    %v127 = vrot.slane %v126, 2
    %v128 = vadd.f32 %v126, %v127
    %v129 = vrot.slane %v128, 1
    %v130 = vadd.f32 %v128, %v129
    %131 = vst [vmem:[#allocation7] sm:$0x1] %v130
    %v132 = vrot.slane %v67, 4
    %v133 = vadd.f32 %v67, %v132
    %v134 = vrot.slane %v133, 2
    %v135 = vadd.f32 %v133, %v134
    %v136 = vrot.slane %v135, 1
    %v137 = vadd.f32 %v135, %v136
    %138 = vst [vmem:[#allocation8] sm:$0x1] %v137
    // Predicated region
    $region22: #{tpu_custom_call.1} parent=1 // pred_check
      _
    $region23: #{tpu_custom_call.1} parent=1 // pred_check_branch
      %140 = sbr.rel (0) target = $region25
    $region24: #{tpu_custom_call.1} parent=1 // pred_region
      %s142 = ssub.s32 16, 16
      %143 = vsyncadd [#allocation4], %s142
      %s145 = sshll.u32 [#allocation7], 4
      %s146 = int_to_ptr.vmem [resolvable:$true] %s145
      %148 = dma.vmem_to_hbm [thread:$0]  %s146, 16, %s3, [#allocation4]
    $region25: #{tpu_custom_call.1} parent=1 // pred_fallthru
      _
    // Predicated region
    $region26: #{tpu_custom_call.1} parent=1 // pred_check
      _
    $region27: #{tpu_custom_call.1} parent=1 // pred_check_branch
      %150 = sbr.rel (0) target = $region29
    $region28: #{tpu_custom_call.1} parent=1 // pred_region
      %s152 = ssub.s32 16, 16
      %153 = vsyncadd [#allocation9], %s152
      %s155 = sshll.u32 [#allocation8], 4
      %s156 = int_to_ptr.vmem [resolvable:$true] %s155
      %158 = dma.vmem_to_hbm [thread:$0]  %s156, 16, %s4, [#allocation9]
    $region29: #{tpu_custom_call.1} parent=1 // pred_fallthru
      _
    // Predicated region
    $region30: #{tpu_custom_call.1} parent=1 // pred_check
      _
    $region31: #{tpu_custom_call.1} parent=1 // pred_check_branch
      %160 = sbr.rel (0) target = $region33
    $region32: #{tpu_custom_call.1} parent=1 // pred_region
      %161 = dma.done [#allocation4], 16
    $region33: #{tpu_custom_call.1} parent=1 // pred_fallthru
      _
    // Predicated region
    $region34: #{tpu_custom_call.1} parent=1 // pred_check
      _
    $region35: #{tpu_custom_call.1} parent=1 // pred_check_branch
      %163 = sbr.rel (0) target = $region37
    $region36: #{tpu_custom_call.1} parent=1 // pred_region
      %164 = dma.done [#allocation9], 16
    $region37: #{tpu_custom_call.1} parent=1 // pred_fallthru
      _
    %165 = vsyncpa [#allocation3], 1
    %166 = vsyncpa [#allocation6], 1
    %167 = vsyncpa [#allocation4], 1
    %168 = vsyncpa [#allocation9], 1

</llo_original>
